<compile_context>
chip_gen: v7x
topology: tpu7x:2x2x1
jax: 0.10.0
libtpu: 0.0.40
codegen_flags: <defaults>
</compile_context>

<pallas_src>
import functools

import jax
import jax.numpy as jnp
from jax.experimental import pallas as pl
from jax.experimental.pallas import tpu as pltpu


def theory_kernel(xp_ref, xn_ref, w_ref, b_ref, sat_ref, *, n_pos, n_neg):
    """Fused predicate eval A(x)=sigmoid(x@w+b) + LTN fuzzy aggregation."""
    w_row = w_ref[...]                   # (1, D) f32, VMEM
    bias = b_ref[0]                      # scalar, SMEM

    # Predicate: VPU broadcast-mul + last-axis XLU reduce (no MXU push/pop for
    # this tiny shape), EUP sigmoid.
    pred_p = jax.nn.sigmoid(
        jnp.sum(xp_ref[...] * w_row, axis=-1, keepdims=True) + bias)   # (n_pos, 1)
    pred_n = jax.nn.sigmoid(
        jnp.sum(xn_ref[...] * w_row, axis=-1, keepdims=True) + bias)   # (n_neg, 1)

    # a = mean((1 - A(x_pos))^2),  b = mean(A(x_neg)^2) — computed directly on
    # the two operands (no concat, no iota/mask/select, post-reduce 1/N scale).
    a = jnp.sum((1.0 - pred_p) ** 2) * (1.0 / n_pos)
    b = jnp.sum(pred_n ** 2) * (1.0 / n_neg)

    # SatAgg = 1 - 0.5*sqrt(a + b)   (algebraically identical to the original
    # 1 - 0.5*((1-(1-a)) + (1-(1-b)))**0.5 )
    sat_ref[0, 0] = 1.0 - 0.5 * jnp.sqrt(a + b)


def theory_forward(x_pos, x_neg, w, bias):
    """Wrapper: one Pallas call on the two polarities; loss derived in-graph."""
    n_pos, d = x_pos.shape
    n_neg, _ = x_neg.shape
    r = n_pos + n_neg

    xp = x_pos.astype(jnp.float32)                          # (n_pos, D)
    xn = x_neg.astype(jnp.float32)                          # (n_neg, D)
    w_row = jnp.reshape(w, (1, d)).astype(jnp.float32)      # (1, D)
    b_smem = jnp.reshape(bias, (1,)).astype(jnp.float32)    # (1,)

    cost = pl.CostEstimate(
        flops=2 * r * d + 10 * r + 8,       # mul+reduce, sigmoid glue, agg
        transcendentals=2 * r + 1,          # sigmoid = exp + recip per row, + sqrt
        bytes_accessed=4 * (r * d + d + 1 + 1),
    )

    sat = pl.pallas_call(
        functools.partial(theory_kernel, n_pos=n_pos, n_neg=n_neg),
        out_shape=jax.ShapeDtypeStruct((1, 1), jnp.float32),
        in_specs=[
            pl.BlockSpec(memory_space=pltpu.MemorySpace.VMEM),   # x_pos
            pl.BlockSpec(memory_space=pltpu.MemorySpace.VMEM),   # x_neg
            pl.BlockSpec(memory_space=pltpu.MemorySpace.VMEM),   # w as (1, D)
            pl.BlockSpec(memory_space=pltpu.MemorySpace.SMEM),   # bias scalar
        ],
        out_specs=pl.BlockSpec(memory_space=pltpu.MemorySpace.SMEM),  # (1,1) scalar
        cost_estimate=cost,
    )(xp, xn, w_row, b_smem)

    sat = sat[0, 0]
    loss = 1.0 - sat          # Theory._lossfn, fused by XLA in the wrapper
    return sat, loss


def theory_forward_ref(x_pos, x_neg, w, bias):
    """Pure-JAX reference mirroring the PyTorch forward exactly."""
    pred_p = jax.nn.sigmoid(x_pos @ w + bias[0, 0])
    pred_n = jax.nn.sigmoid(x_neg @ w + bias[0, 0])
    a = jnp.mean((1.0 - pred_p) ** 2)
    b = jnp.mean(pred_n ** 2)
    sat = 1.0 - 0.5 * ((1.0 - (1.0 - a)) + (1.0 - (1.0 - b))) ** 0.5
    return sat, 1.0 - sat


if __name__ == "__main__":
    N, D = 8, 32  # examples per polarity, feature width

    key = jax.random.PRNGKey(0)
    k_pos, k_neg, k_w, k_b = jax.random.split(key, 4)

    x_pos = jax.random.normal(k_pos, (N, D), dtype=jnp.float32)
    x_neg = jax.random.normal(k_neg, (N, D), dtype=jnp.float32)

    # Deterministic synthetic predicate parameters (grounding of 'A').
    w = 0.1 * jax.random.normal(k_w, (D, 1), dtype=jnp.float32)
    bias = 0.05 * jax.random.normal(k_b, (1, 1), dtype=jnp.float32)

    sat, loss = theory_forward(x_pos, x_neg, w, bias)
    sat, loss = jax.block_until_ready((sat, loss))

    sat_ref, loss_ref = theory_forward_ref(x_pos, x_neg, w, bias)
    assert jnp.allclose(sat, sat_ref, atol=1e-5), (sat, sat_ref)
    assert jnp.allclose(loss, loss_ref, atol=1e-5), (loss, loss_ref)

    print("KERNEL_OK")
</pallas_src>

<mosaic_0001>
module attributes {stable_mosaic.version = 11 : i64} {
  func.func @theory_kernel(%arg0: memref<8x32xf32, #tpu.memory_space<vmem>>, %arg1: memref<8x32xf32, #tpu.memory_space<vmem>>, %arg2: memref<1x32xf32, #tpu.memory_space<vmem>>, %arg3: memref<1xf32, #tpu.memory_space<smem>>, %arg4: memref<1x1xf32, #tpu.memory_space<smem>>) attributes {dimension_semantics = [], scalar_prefetch = 0 : i64, scratch_operands = 0 : i64, tpu.core_type = #tpu.core_type<tc>} {
    %c0 = arith.constant 0 : index
    %c0_0 = arith.constant 0 : index
    %0 = vector.load %arg2[%c0, %c0_0] : memref<1x32xf32, #tpu.memory_space<vmem>>, vector<1x32xf32>
    %c0_1 = arith.constant 0 : index
    %1 = memref.load %arg3[%c0_1] : memref<1xf32, #tpu.memory_space<smem>>
    %c0_2 = arith.constant 0 : index
    %c0_3 = arith.constant 0 : index
    %2 = vector.load %arg0[%c0_2, %c0_3] : memref<8x32xf32, #tpu.memory_space<vmem>>, vector<8x32xf32>
    %3 = vector.broadcast %0 : vector<1x32xf32> to vector<8x32xf32>
    %4 = arith.mulf %2, %3 : vector<8x32xf32>
    %cst = arith.constant dense<0.000000e+00> : vector<8xf32>
    %5 = vector.multi_reduction <add>, %4, %cst [1] : vector<8x32xf32> to vector<8xf32>
    %6 = vector.shape_cast %5 : vector<8xf32> to vector<8x1xf32>
    %7 = vector.broadcast %1 : f32 to vector<8x1xf32>
    %8 = arith.addf %6, %7 : vector<8x1xf32>
    %9 = arith.negf %8 : vector<8x1xf32>
    %10 = math.exp %9 : vector<8x1xf32>
    %cst_4 = arith.constant 1.000000e+00 : f32
    %11 = vector.broadcast %cst_4 : f32 to vector<8x1xf32>
    %12 = arith.addf %11, %10 : vector<8x1xf32>
    %13 = arith.divf %11, %12 : vector<8x1xf32>
    %c0_5 = arith.constant 0 : index
    %c0_6 = arith.constant 0 : index
    %14 = vector.load %arg1[%c0_5, %c0_6] : memref<8x32xf32, #tpu.memory_space<vmem>>, vector<8x32xf32>
    %15 = vector.broadcast %0 : vector<1x32xf32> to vector<8x32xf32>
    %16 = arith.mulf %14, %15 : vector<8x32xf32>
    %cst_7 = arith.constant dense<0.000000e+00> : vector<8xf32>
    %17 = vector.multi_reduction <add>, %16, %cst_7 [1] : vector<8x32xf32> to vector<8xf32>
    %18 = vector.shape_cast %17 : vector<8xf32> to vector<8x1xf32>
    %19 = vector.broadcast %1 : f32 to vector<8x1xf32>
    %20 = arith.addf %18, %19 : vector<8x1xf32>
    %21 = arith.negf %20 : vector<8x1xf32>
    %22 = math.exp %21 : vector<8x1xf32>
    %cst_8 = arith.constant 1.000000e+00 : f32
    %23 = vector.broadcast %cst_8 : f32 to vector<8x1xf32>
    %24 = arith.addf %23, %22 : vector<8x1xf32>
    %25 = arith.divf %23, %24 : vector<8x1xf32>
    %cst_9 = arith.constant 1.000000e+00 : f32
    %26 = vector.broadcast %cst_9 : f32 to vector<8x1xf32>
    %27 = arith.subf %26, %13 : vector<8x1xf32>
    %28 = arith.mulf %27, %27 : vector<8x1xf32>
    %29 = vector.shape_cast %28 : vector<8x1xf32> to vector<1x8x1xf32>
    %cst_10 = arith.constant dense<0.000000e+00> : vector<1xf32>
    %30 = vector.multi_reduction <add>, %29, %cst_10 [1, 2] : vector<1x8x1xf32> to vector<1xf32>
    %31 = vector.shape_cast %30 : vector<1xf32> to vector<1x1x1xf32>
    %32 = vector.extract %31[0, 0, 0] : f32 from vector<1x1x1xf32>
    %cst_11 = arith.constant 1.250000e-01 : f32
    %33 = arith.mulf %32, %cst_11 : f32
    %34 = arith.mulf %25, %25 : vector<8x1xf32>
    %35 = vector.shape_cast %34 : vector<8x1xf32> to vector<1x8x1xf32>
    %cst_12 = arith.constant dense<0.000000e+00> : vector<1xf32>
    %36 = vector.multi_reduction <add>, %35, %cst_12 [1, 2] : vector<1x8x1xf32> to vector<1xf32>
    %37 = vector.shape_cast %36 : vector<1xf32> to vector<1x1x1xf32>
    %38 = vector.extract %37[0, 0, 0] : f32 from vector<1x1x1xf32>
    %cst_13 = arith.constant 1.250000e-01 : f32
    %39 = arith.mulf %38, %cst_13 : f32
    %40 = arith.addf %33, %39 : f32
    %41 = math.sqrt %40 : f32
    %cst_14 = arith.constant 5.000000e-01 : f32
    %42 = arith.mulf %cst_14, %41 : f32
    %cst_15 = arith.constant 1.000000e+00 : f32
    %43 = arith.subf %cst_15, %42 : f32
    %c0_16 = arith.constant 0 : index
    %c0_17 = arith.constant 0 : index
    %44 = memref.load %arg4[%c0_16, %c0_17] : memref<1x1xf32, #tpu.memory_space<smem>>
    memref.store %43, %arg4[%c0_16, %c0_17] : memref<1x1xf32, #tpu.memory_space<smem>>
    return
  }
}

</mosaic_0001>

<llo_original>
// kernel: tpu_custom_call.1
$region0: #{tpu_custom_call.1}
  #allocation0 [shape = 'u32[]', space=smem, size = 0x4, offset = 0x4, fixed_abs, tag = 'smem constant byte address 0x4 - core index']
  #allocation1 [shape = 'u32[144,128]{1,0:T(1,128)}', space=vmem, size = 0x12000, scoped, tag = 'internal scratch']
  #allocation2 [shape = 'f32[1]{0:T(128)S(6)}', space=smem, size = 0x200, scoped, tag = 'scoped memory for tpu_custom_call.1']
  %s0 = inlined_call_operand.hbm [shape: f32[8,32], index: 0, kind: input, shape index: {}]
  %s1 = inlined_call_operand.hbm [shape: f32[8,32], index: 1, kind: input, shape index: {}]
  %s2 = inlined_call_operand.vmem [shape: f32[1,32], index: 2, kind: input, shape index: {}]
  %s3 = inlined_call_operand.<no memory space> [shape: f32[1], index: 3, kind: input, shape index: {}]
  %s4 = inlined_call_operand.hbm [shape: f32[1,1], index: 4, kind: output, shape index: {}]
  %s5 = sld [smem:[#allocation0]]
  $region34: #{tpu_custom_call.1} parent=0
    _
  %s7 = ssub.s32 1, %s5
  %s8 = scalar_select 0, %s7, %s5
  %9 = sst [smem:[#allocation2]] %s3
  $region1: #{tpu_custom_call.1} parent=0
    #allocation3 [shape = 'u8[4096]{0}', space=vmem, size = 0x1000, scoped, tag = 'input window, operand 0, single buffered']
    #allocation4 [shape = 's32[1]{0}', space=sflag, size = 0x4, scoped, tag = 'scoped memory for tpu_custom_call.1']
    #allocation5 [shape = 's32[1]{0}', space=sflag, size = 0x4, scoped, tag = 'scoped memory for tpu_custom_call.1']
    #allocation6 [shape = 'u8[4096]{0}', space=vmem, size = 0x1000, scoped, tag = 'input window, operand 1, single buffered']
    #allocation7 [shape = 's32[1]{0}', space=sflag, size = 0x4, scoped, tag = 'scoped memory for tpu_custom_call.1']
    #allocation8 [shape = 'u8[512]{0}', space=smem, size = 0x200, scoped, tag = 'output window, operand 0, single buffered']
    %10 = vsyncpa [#allocation4], 0
    %11 = vsyncpa [#allocation7], 0
    %12 = vsyncpa [#allocation5], 0
    // Predicated region
    $region2: #{tpu_custom_call.1} parent=1 // pred_check
      _
    $region3: #{tpu_custom_call.1} parent=1 // pred_check_branch
      %14 = sbr.rel (0) target = $region5
    $region4: #{tpu_custom_call.1} parent=1 // pred_region
      %s16 = ssub.s32 128, 128
      %17 = vsyncadd [#allocation4], %s16
      %s19 = sshll.u32 [#allocation3], 4
      %s20 = int_to_ptr.vmem [resolvable:$true] %s19
      %22 = dma.hbm_to_vmem [thread:$0]  %s0, 128, %s20, [#allocation4]
    $region5: #{tpu_custom_call.1} parent=1 // pred_fallthru
      _
    // Predicated region
    $region6: #{tpu_custom_call.1} parent=1 // pred_check
      _
    $region7: #{tpu_custom_call.1} parent=1 // pred_check_branch
      %24 = sbr.rel (0) target = $region9
    $region8: #{tpu_custom_call.1} parent=1 // pred_region
      %s26 = ssub.s32 128, 128
      %27 = vsyncadd [#allocation7], %s26
      %s29 = sshll.u32 [#allocation6], 4
      %s30 = int_to_ptr.vmem [resolvable:$true] %s29
      %32 = dma.hbm_to_vmem [thread:$0]  %s1, 128, %s30, [#allocation7]
    $region9: #{tpu_custom_call.1} parent=1 // pred_fallthru
      _
    // Predicated region
    $region10: #{tpu_custom_call.1} parent=1 // pred_check
      _
    $region11: #{tpu_custom_call.1} parent=1 // pred_check_branch
      %34 = sbr.rel (0) target = $region13
    $region12: #{tpu_custom_call.1} parent=1 // pred_region
      _
    $region13: #{tpu_custom_call.1} parent=1 // pred_fallthru
      _
    // Predicated region
    $region14: #{tpu_custom_call.1} parent=1 // pred_check
      _
    $region15: #{tpu_custom_call.1} parent=1 // pred_check_branch
      %36 = sbr.rel (0) target = $region17
    $region16: #{tpu_custom_call.1} parent=1 // pred_region
      _
    $region17: #{tpu_custom_call.1} parent=1 // pred_fallthru
      _
    // Predicated region
    $region18: #{tpu_custom_call.1} parent=1 // pred_check
      _
    $region19: #{tpu_custom_call.1} parent=1 // pred_check_branch
      %38 = sbr.rel (0) target = $region21
    $region20: #{tpu_custom_call.1} parent=1 // pred_region
      %39 = dma.done [#allocation4], 128
    $region21: #{tpu_custom_call.1} parent=1 // pred_fallthru
      _
    // Predicated region
    $region22: #{tpu_custom_call.1} parent=1 // pred_check
      _
    $region23: #{tpu_custom_call.1} parent=1 // pred_check_branch
      %41 = sbr.rel (0) target = $region25
    $region24: #{tpu_custom_call.1} parent=1 // pred_region
      %42 = dma.done [#allocation7], 128
    $region25: #{tpu_custom_call.1} parent=1 // pred_fallthru
      _
    %v43 = vld [vmem:[%s2] sm:$0x1]
    %s44 = sld [smem:[#allocation2]]
    %v45 = vld [vmem:[#allocation3] sm:$0xff]
    %v47 = vlaneseq
    %v48 = vshrl.u32 %v47, 7
    %v49 = vsub.s32 0, %v48
    %v50 = vrot.slane %v43, %v49
    %v52 = vmul.f32 %v45, %v50
    %vm53 = vcmask 261120
    %v54 = vsel %vm53, %v52, 0.0
    %55 = vadd.xlane.f32.xlu0 %v54
    %v56 = vpop.xlane.xlu0 %55
    %v57 = vstv %s44
    %v58 = vadd.f32 %v56, %v57
    %v59 = vxor.u32 %v58, 2147483648
    %v60 = vmul.f32 %v59, 1.442695
    %v61 = vpow.pop %v60
    %v62 = vadd.f32 %v61, 1.0
    %v63 = vrcp.pop %v62
    %v64 = vmul.f32 1.0, %v63
    %v65 = vld [vmem:[#allocation6] sm:$0xff]
    %v66 = vmul.f32 %v65, %v50
    %v67 = vsel %vm53, %v66, 0.0
    %68 = vadd.xlane.f32.xlu0 %v67
    %v69 = vpop.xlane.xlu0 %68
    %v70 = vadd.f32 %v69, %v57
    %v71 = vxor.u32 %v70, 2147483648
    %v72 = vmul.f32 %v71, 1.442695
    %v73 = vpow.pop %v72
    %v74 = vadd.f32 %v73, 1.0
    %v75 = vrcp.pop %v74
    %v76 = vmul.f32 1.0, %v75
    %v77 = vsub.f32 1.0, %v64
    %v78 = vmul.f32 %v77, %v77
    %vm79 = vcmask 7168
    %v80 = vsel %vm79, %v78, 0.0
    %81 = vadd.xlane.f32.xlu0 %v80
    %v82 = vpop.xlane.xlu0 %81
    %v83 = vrot.slane %v82, 4
    %v84 = vadd.f32 %v82, %v83
    %v85 = vrot.slane %v84, 2
    %v86 = vadd.f32 %v84, %v85
    %v87 = vrot.slane %v86, 1
    %v88 = vadd.f32 %v86, %v87
    %s89 = vtos %v88
    %s90 = smul.f32 %s89, 0.125
    %v91 = vmul.f32 %v76, %v76
    %v92 = vsel %vm79, %v91, 0.0
    %93 = vadd.xlane.f32.xlu0 %v92
    %v94 = vpop.xlane.xlu0 %93
    %v95 = vrot.slane %v94, 4
    %v96 = vadd.f32 %v94, %v95
    %v97 = vrot.slane %v96, 2
    %v98 = vadd.f32 %v96, %v97
    %v99 = vrot.slane %v98, 1
    %v100 = vadd.f32 %v98, %v99
    %s101 = vtos %v100
    %s102 = smul.f32 %s101, 0.125
    %s103 = sadd.f32 %s90, %s102
    %v104 = vstv %s103
    %v105 = vrsqrt.pop %v104
    %v106 = vmul.f32 %v104, %v105
    %vm107 = vcmp.eq.f32.partialorder %v104, inf
    %v108 = vsel %vm107, %v104, %v106
    %vm109 = vcmp.eq.f32.partialorder %v104, 0.0
    %v110 = vand.u32 %v104, 2147483648
    %v111 = vsel %vm109, %v110, %v108
    %s112 = vtos %v111
    %s113 = smul.f32 %s112, 0.5
    %s114 = ssub.f32 1.0, %s113
    %s115 = scalar_lea.smem [#allocation8], 0
    %116 = sst [smem:[%s115]] %s114
    // Predicated region
    $region26: #{tpu_custom_call.1} parent=1 // pred_check
      _
    $region27: #{tpu_custom_call.1} parent=1 // pred_check_branch
      %118 = sbr.rel (0) target = $region29
    $region28: #{tpu_custom_call.1} parent=1 // pred_region
      %s120 = ssub.s32 16, 16
      %121 = vsyncadd [#allocation5], %s120
      %124 = dma.smem_to_hbm [#allocation8], 16, %s4, [#allocation5]
    $region29: #{tpu_custom_call.1} parent=1 // pred_fallthru
      _
    // Predicated region
    $region30: #{tpu_custom_call.1} parent=1 // pred_check
      _
    $region31: #{tpu_custom_call.1} parent=1 // pred_check_branch
      %126 = sbr.rel (0) target = $region33
    $region32: #{tpu_custom_call.1} parent=1 // pred_region
      %127 = dma.done [#allocation5], 16
    $region33: #{tpu_custom_call.1} parent=1 // pred_fallthru
      _
    %128 = sfence
    %129 = vsyncpa [#allocation4], 1
    %130 = vsyncpa [#allocation7], 1
    %131 = vsyncpa [#allocation5], 1

</llo_original>
